<compile_context>
chip_gen: v7x
topology: tpu7x:2x2x1
jax: 0.10.0
libtpu: 0.0.40
codegen_flags: <defaults>
</compile_context>

<pallas_src>
import functools
import math

import jax
import jax.numpy as jnp
from jax import lax
from jax.experimental import pallas as pl
from jax.experimental.pallas import tpu as pltpu


# ---------------------------------------------------------------------------
# helpers
# ---------------------------------------------------------------------------

def _round_up(x, m):
    return ((x + m - 1) // m) * m


def _row_block(n):
    """Sublane-aligned row block: large enough to amortize per-step overhead,
    small enough to stay far below scoped VMEM on every generation, and giving
    >= 2 grid steps when possible so v7x's two TensorCores both get work."""
    if n <= 8:
        return n                      # block == full dim (tiling rule satisfied)
    return min(256, _round_up(max(n // 2, 8), 8))


def _pad_rows(x, tn):
    n = x.shape[0]
    n_pad = _round_up(n, tn)
    if n_pad == n:
        return x
    return jnp.pad(x, ((0, n_pad - n),) + ((0, 0),) * (x.ndim - 1))


# 32 MiB scoped VMEM is safe on v5e/v6e/v7x; the blocks used here are tiny (<< 1 MiB).
_COMPILER_PARAMS = pltpu.CompilerParams(
    dimension_semantics=("parallel",),
    vmem_limit_bytes=32 * 1024 * 1024,
)


# ---------------------------------------------------------------------------
# Pallas kernels
# ---------------------------------------------------------------------------

def _linear_kernel(x_ref, w_ref, b_ref, o_ref):
    # x: (TN, Din)  w: (Din, Dout)  b: (1, Dout)  o: (TN, Dout)
    o_ref[...] = (jnp.dot(x_ref[...], w_ref[...],
                          preferred_element_type=jnp.float32)
                  + b_ref[...]).astype(o_ref.dtype)


def linear_pallas(x, w, b):
    """Row-blocked fused y = x @ w + b.  x: (N, Din), w: (Din, Dout), b: (Dout,)."""
    n, din = x.shape
    dout = w.shape[1]
    tn = _row_block(n)
    xp = _pad_rows(x, tn)
    n_pad = xp.shape[0]
    out = pl.pallas_call(
        _linear_kernel,
        out_shape=jax.ShapeDtypeStruct((n_pad, dout), x.dtype),
        grid_spec=pltpu.PrefetchScalarGridSpec(
            num_scalar_prefetch=0,
            grid=(n_pad // tn,),
            in_specs=[
                pl.BlockSpec((tn, din), lambda i: (i, 0)),
                pl.BlockSpec((din, dout), lambda i: (0, 0)),
                pl.BlockSpec((1, dout), lambda i: (0, 0)),
            ],
            out_specs=pl.BlockSpec((tn, dout), lambda i: (i, 0)),
        ),
        compiler_params=_COMPILER_PARAMS,
    )(xp, w, b.reshape(1, dout))
    return out[:n]


def _offset_kernel(xc_ref, w1_ref, b1_ref, w2_ref, b2_ref, alpha_ref, o_ref):
    # xc: (TN, 9*d) im2col rows | w1: (9*d, d) | w2: (d, 2) | alpha: (1, 1)
    h = jnp.dot(xc_ref[...], w1_ref[...],
                preferred_element_type=jnp.float32) + b1_ref[...]
    off = jnp.dot(h, w2_ref[...],
                  preferred_element_type=jnp.float32) + b2_ref[...]
    o_ref[...] = (alpha_ref[0, 0] * jnp.tanh(off)).astype(o_ref.dtype)


def offset_pallas(xcol, w1_mat, b1, w2_mat, b2, alpha):
    n, din = xcol.shape
    dmid = w1_mat.shape[1]
    tn = _row_block(n)
    xp = _pad_rows(xcol, tn)
    n_pad = xp.shape[0]
    out = pl.pallas_call(
        _offset_kernel,
        out_shape=jax.ShapeDtypeStruct((n_pad, 2), xcol.dtype),
        grid_spec=pltpu.PrefetchScalarGridSpec(
            num_scalar_prefetch=0,
            grid=(n_pad // tn,),
            in_specs=[
                pl.BlockSpec((tn, din), lambda i: (i, 0)),
                pl.BlockSpec((din, dmid), lambda i: (0, 0)),
                pl.BlockSpec((1, dmid), lambda i: (0, 0)),
                pl.BlockSpec((dmid, 2), lambda i: (0, 0)),
                pl.BlockSpec((1, 2), lambda i: (0, 0)),
                pl.BlockSpec((1, 1), lambda i: (0, 0)),
            ],
            out_specs=pl.BlockSpec((tn, 2), lambda i: (i, 0)),
        ),
        compiler_params=_COMPILER_PARAMS,
    )(xp, w1_mat, b1.reshape(1, dmid), w2_mat, b2.reshape(1, 2),
      jnp.full((1, 1), alpha, dtype=xcol.dtype))
    return out[:n]


def _attn_core_kernel(q_ref, k_ref, v_ref, o_ref, *, scale):
    # q, k, v, o: (P, l, d) — per-patch attention, batched over P (MXU matmuls).
    q = q_ref[...]
    k = k_ref[...]
    v = v_ref[...]
    s = jnp.einsum('pqd,pkd->pqk', q, k,
                   preferred_element_type=jnp.float32) * scale
    m = jnp.max(s, axis=-1, keepdims=True)
    e = jnp.exp(s - m)
    attn = e / jnp.sum(e, axis=-1, keepdims=True)
    o_ref[...] = jnp.einsum('pqk,pkd->pqd', attn, v,
                            preferred_element_type=jnp.float32).astype(o_ref.dtype)


def attention_core_pallas(q, k, v):
    # q, k, v: (P, l, d); whole problem fits easily in VMEM -> one grid step.
    P, l, d = q.shape
    kern = functools.partial(_attn_core_kernel, scale=1.0 / math.sqrt(d))
    full = pl.BlockSpec((P, l, d), lambda i: (0, 0, 0))
    return pl.pallas_call(
        kern,
        out_shape=jax.ShapeDtypeStruct((P, l, d), q.dtype),
        grid_spec=pltpu.PrefetchScalarGridSpec(
            num_scalar_prefetch=0,
            grid=(1,),
            in_specs=[full, full, full],
            out_specs=pl.BlockSpec((P, l, d), lambda i: (0, 0, 0)),
        ),
        compiler_params=_COMPILER_PARAMS,
    )(q, k, v)


def _tail_kernel(a_ref, res_ref,
                 wi_ref, bi_ref, wo_ref, bo_ref,
                 wr_ref, br_ref, g_ref, beta_ref,
                 w1_ref, b1_ref, w2_ref, b2_ref,
                 o_ref, *, eps):
    # a: (TN, d) attention rows; res: (TN, D). Lane-dense D/H output, all dots on MXU.
    t = jnp.dot(a_ref[...], wi_ref[...],
                preferred_element_type=jnp.float32) + bi_ref[...]          # Wi
    zv = jnp.dot(t, wo_ref[...],
                 preferred_element_type=jnp.float32) + bo_ref[...]         # Wv
    u = jnp.dot(zv, wr_ref[...],
                preferred_element_type=jnp.float32) + br_ref[...] + res_ref[...]  # recover + res
    mu = jnp.mean(u, axis=-1, keepdims=True)
    xc = u - mu
    var = jnp.mean(xc * xc, axis=-1, keepdims=True)
    yn = xc * lax.rsqrt(var + eps) * g_ref[...] + beta_ref[...]            # LayerNorm
    h = jnp.maximum(
        jnp.dot(yn, w1_ref[...], preferred_element_type=jnp.float32) + b1_ref[...], 0.0)
    y = jnp.dot(h, w2_ref[...], preferred_element_type=jnp.float32) + b2_ref[...]
    o_ref[...] = (y + u).astype(o_ref.dtype)


def tail_pallas(a, res, wi, bi, wo, bo, wr, br, gamma, beta, w1, b1, w2, b2, eps=1e-5):
    n, d = a.shape
    D = res.shape[1]
    H = w1.shape[1]
    tn = _row_block(n)
    ap = _pad_rows(a, tn)
    rp = _pad_rows(res, tn)
    n_pad = ap.shape[0]

    def full(shape):
        return pl.BlockSpec(shape, lambda i, _nd=len(shape): (0,) * _nd)

    out = pl.pallas_call(
        functools.partial(_tail_kernel, eps=eps),
        out_shape=jax.ShapeDtypeStruct((n_pad, D), a.dtype),
        grid_spec=pltpu.PrefetchScalarGridSpec(
            num_scalar_prefetch=0,
            grid=(n_pad // tn,),
            in_specs=[
                pl.BlockSpec((tn, d), lambda i: (i, 0)),
                pl.BlockSpec((tn, D), lambda i: (i, 0)),
                full((d, d)), full((1, d)),
                full((d, d)), full((1, d)),
                full((d, D)), full((1, D)),
                full((1, D)), full((1, D)),
                full((D, H)), full((1, H)),
                full((H, D)), full((1, D)),
            ],
            out_specs=pl.BlockSpec((tn, D), lambda i: (i, 0)),
        ),
        compiler_params=_COMPILER_PARAMS,
    )(ap, rp,
      wi, bi.reshape(1, d), wo, bo.reshape(1, d),
      wr, br.reshape(1, D), gamma.reshape(1, D), beta.reshape(1, D),
      w1, b1.reshape(1, H), w2, b2.reshape(1, D))
    return out[:n]


# ---------------------------------------------------------------------------
# plain-JAX glue (layout + irregular gather)
# ---------------------------------------------------------------------------

def segment_sequence(x, l, s):
    """(B, L, d) -> (B, n, l, d) overlapping patches with zero right-padding."""
    B, L, d = x.shape
    pad_len = (s - (L - l) % s) % s
    xp = jnp.pad(x, ((0, 0), (0, pad_len), (0, 0)))
    Lp = L + pad_len
    n = (Lp - l) // s + 1
    idx = jnp.arange(n)[:, None] * s + jnp.arange(l)[None, :]
    return xp[:, idx, :], n


def im2col_3x3(x):
    """(B, n, l, d) -> (B*n*l, 9*d) taps of a 3x3 'same' (zero padded) conv."""
    B, n, l, d = x.shape
    xp = jnp.pad(x, ((0, 0), (1, 1), (1, 1), (0, 0)))
    taps = [xp[:, kh:kh + n, kw:kw + l, :] for kh in range(3) for kw in range(3)]
    col = jnp.stack(taps, axis=3)                 # (B, n, l, 9, d)
    return col.reshape(B * n * l, 9 * d)


def bilinear_interpolation(zp, delta_p):
    """Reproduces VariableDeformableAttentionBlock.bilinear_interpolation:
    each patch (l, d) is treated as an image, a single scalar is bilinearly
    sampled at (row + dx, dy) with python int() truncation semantics and
    out-of-bounds corners zeroed, then broadcast across the feature dim."""
    B, n, l, d = zp.shape
    base = jnp.arange(l, dtype=zp.dtype)
    x = base[None, None, :] + delta_p[..., 0]     # (B, n, l)
    y = delta_p[..., 1]
    x0 = jnp.trunc(x).astype(jnp.int32)           # int() truncates toward zero
    y0 = jnp.trunc(y).astype(jnp.int32)
    x1 = jnp.minimum(x0 + 1, l - 1)
    y1 = jnp.minimum(y0 + 1, d - 1)
    flat = zp.reshape(B, n, l * d)

    def sample(xi, yi):
        valid = (xi >= 0) & (xi < l) & (yi >= 0) & (yi < d)
        idx = jnp.clip(xi, 0, l - 1) * d + jnp.clip(yi, 0, d - 1)
        vals = jnp.take_along_axis(flat, idx, axis=-1)
        return jnp.where(valid, vals, 0.0)

    Ia = sample(x0, y0)
    Ib = sample(x1, y0)
    Ic = sample(x0, y1)
    Id = sample(x1, y1)
    x0f, x1f = x0.astype(zp.dtype), x1.astype(zp.dtype)
    y0f, y1f = y0.astype(zp.dtype), y1.astype(zp.dtype)
    wa = (x1f - x) * (y1f - y)
    wb = (x - x0f) * (y1f - y)
    wc = (x1f - x) * (y - y0f)
    wd = (x - x0f) * (y - y0f)
    val = wa * Ia + wb * Ib + wc * Ic + wd * Id   # (B, n, l)
    return jnp.broadcast_to(val[..., None], zp.shape)


# ---------------------------------------------------------------------------
# full forward (Pallas) and pure-JAX reference
# ---------------------------------------------------------------------------

def vdab_forward_pallas(x, p, *, l_patch=10, s_stride=5):
    B, L, M, S = x.shape
    D = M * S
    d = p['fc_w'].shape[1]

    xf = x.reshape(B, L, D)
    res = xf.reshape(B * L, D)

    # fc: D -> d
    xq = linear_pallas(xf.reshape(B * L, D), p['fc_w'], p['fc_b']).reshape(B, L, d)

    # --- VariableDeformableAttentionBlock ---
    zp, n = segment_sequence(xq, l_patch, s_stride)             # (B, n, l, d)
    rows = B * n * l_patch
    zp2 = zp.reshape(rows, d)

    qp = linear_pallas(zp2, p['wq_w'], p['wq_b']).reshape(B, n, l_patch, d)   # WQ

    # offsets: conv1(3x3, im2col) + conv2(1x1) + tanh + alpha, fused in one kernel
    xcol = im2col_3x3(qp)
    delta = offset_pallas(xcol, p['conv1_w_mat'], p['conv1_b'],
                          p['conv2_w'], p['conv2_b'], p['alpha'])
    delta_p = delta.reshape(B, n, l_patch, 2)

    # TODO(synk): data-dependent bilinear scalar gather (python int() truncation
    # semantics) kept in plain JAX — no clean Pallas tiling for this irregular gather.
    zd = bilinear_interpolation(zp, delta_p)

    zd2 = zd.reshape(rows, d)
    kd = linear_pallas(zd2, p['wk_w'], p['wk_b']).reshape(B * n, l_patch, d)  # WK
    vd = linear_pallas(zd2, p['wv_w'], p['wv_b']).reshape(B * n, l_patch, d)  # WV
    qb = qp.reshape(B * n, l_patch, d)

    ai = attention_core_pallas(qb, kd, vd)                       # softmax(QK^T)V
    # view(B, n*l, d) + slice to L. Wi / Wv / recover / LN / MLP are row-wise,
    # so they are fused into the lane-dense tail kernel on exactly B*L rows.
    a_rows = ai.reshape(B, n * l_patch, d)[:, :L, :].reshape(B * L, d)

    out = tail_pallas(a_rows, res,
                      p['wi_w'], p['wi_b'], p['wvv_w'], p['wvv_b'],
                      p['rec_w'], p['rec_b'], p['ln_g'], p['ln_b'],
                      p['mlp1_w'], p['mlp1_b'], p['mlp2_w'], p['mlp2_b'])
    return out.reshape(B, L, M, S)


def vdab_forward_reference(x, p, *, l_patch=10, s_stride=5):
    """Pure-JAX reference of the same math (validates the Pallas composition)."""
    B, L, M, S = x.shape
    D = M * S
    d = p['fc_w'].shape[1]
    xf = x.reshape(B, L, D)
    res = xf
    xq = xf @ p['fc_w'] + p['fc_b']
    zp, n = segment_sequence(xq, l_patch, s_stride)
    qp = zp @ p['wq_w'] + p['wq_b']
    conv1 = lax.conv_general_dilated(
        qp, p['conv1_w'], window_strides=(1, 1), padding='SAME',
        dimension_numbers=('NHWC', 'HWIO', 'NHWC')) + p['conv1_b']
    off = conv1 @ p['conv2_w'] + p['conv2_b']
    delta_p = p['alpha'] * jnp.tanh(off)
    zd = bilinear_interpolation(zp, delta_p)
    kd = zd @ p['wk_w'] + p['wk_b']
    vd = zd @ p['wv_w'] + p['wv_b']
    s = jnp.einsum('bnqd,bnkd->bnqk', qp, kd) * (1.0 / math.sqrt(d))
    attn = jax.nn.softmax(s, axis=-1)
    ai = jnp.einsum('bnqk,bnkd->bnqd', attn, vd)
    ai = ai @ p['wi_w'] + p['wi_b']
    a = ai.reshape(B, n * l_patch, d)
    zv = (a @ p['wvv_w'] + p['wvv_b'])[:, :L, :]
    u = zv @ p['rec_w'] + p['rec_b'] + res
    mu = jnp.mean(u, axis=-1, keepdims=True)
    xc = u - mu
    var = jnp.mean(xc * xc, axis=-1, keepdims=True)
    yn = xc * lax.rsqrt(var + 1e-5) * p['ln_g'] + p['ln_b']
    h = jnp.maximum(yn @ p['mlp1_w'] + p['mlp1_b'], 0.0)
    y = h @ p['mlp2_w'] + p['mlp2_b']
    return (y + u).reshape(B, L, M, S)


# ---------------------------------------------------------------------------
# demo / self-test
# ---------------------------------------------------------------------------

if __name__ == "__main__":
    # Keep reference XLA matmuls and in-kernel MXU matmuls at the same precision.
    jax.config.update("jax_default_matmul_precision", "highest")

    # Config consistent with V_DAB: c_out = M, nvars = S (so M*S == c_out*nvars).
    # Chosen so the fused tail kernel is lane-dense (D = H = 128).
    B, L, M, S = 2, 20, 32, 4          # x_input: (B, L, M, S)
    c_out, nvars, d_ff = M, S, 32
    D = c_out * nvars                  # 128
    H = d_ff * nvars                   # 128
    d = c_out                          # v_dab feature dim = 32
    l_patch, s_stride = 10, 5

    key = jax.random.PRNGKey(0)
    ks = jax.random.split(key, 25)
    f32 = jnp.float32

    def rnd(k, shape, scale):
        return scale * jax.random.normal(k, shape, dtype=f32)

    p = {
        'fc_w': rnd(ks[0], (D, d), 0.08),   'fc_b': rnd(ks[1], (d,), 0.05),
        'wq_w': rnd(ks[2], (d, d), 0.15),   'wq_b': rnd(ks[3], (d,), 0.05),
        'wk_w': rnd(ks[4], (d, d), 0.15),   'wk_b': rnd(ks[5], (d,), 0.05),
        'wv_w': rnd(ks[6], (d, d), 0.15),   'wv_b': rnd(ks[7], (d,), 0.05),
        'wi_w': rnd(ks[8], (d, d), 0.15),   'wi_b': rnd(ks[9], (d,), 0.05),
        'wvv_w': rnd(ks[10], (d, d), 0.15), 'wvv_b': rnd(ks[11], (d,), 0.05),
        'conv1_w': rnd(ks[12], (3, 3, d, d), 0.08), 'conv1_b': rnd(ks[13], (d,), 0.05),
        'conv2_w': rnd(ks[14], (d, 2), 0.15),       'conv2_b': rnd(ks[15], (2,), 0.05),
        'alpha': 1.0,                                            # nn.Parameter init value
        'rec_w': rnd(ks[16], (d, D), 0.12), 'rec_b': rnd(ks[17], (D,), 0.05),
        'ln_g': 1.0 + rnd(ks[18], (D,), 0.1), 'ln_b': rnd(ks[19], (D,), 0.1),
        'mlp1_w': rnd(ks[20], (D, H), 0.1), 'mlp1_b': rnd(ks[21], (H,), 0.05),
        'mlp2_w': rnd(ks[22], (H, D), 0.1), 'mlp2_b': rnd(ks[23], (D,), 0.05),
    }
    p['conv1_w_mat'] = p['conv1_w'].reshape(9 * d, d)   # (kh, kw, c_in) flattened

    x = jax.random.normal(ks[24], (B, L, M, S), dtype=f32)

    out = vdab_forward_pallas(x, p, l_patch=l_patch, s_stride=s_stride)
    out = jax.block_until_ready(out)

    ref = vdab_forward_reference(x, p, l_patch=l_patch, s_stride=s_stride)
    ref = jax.block_until_ready(ref)

    assert out.shape == (B, L, M, S)
    max_err = float(jnp.max(jnp.abs(out - ref)))
    assert jnp.allclose(out, ref, atol=2e-3, rtol=2e-3), \
        f"mismatch vs reference (max abs err {max_err})"
    print("KERNEL_OK")
</pallas_src>

<mosaic_0001>
module attributes {stable_mosaic.version = 11 : i64} {
  func.func @_linear_kernel(%arg0: i32, %arg1: memref<24x128xf32, #tpu.memory_space<vmem>>, %arg2: memref<128x32xf32, #tpu.memory_space<vmem>>, %arg3: memref<1x32xf32, #tpu.memory_space<vmem>>, %arg4: memref<24x32xf32, #tpu.memory_space<vmem>>) attributes {dimension_semantics = [#tpu.dimension_semantics<parallel>], iteration_bounds = array<i64: 2>, scalar_prefetch = 0 : i64, scratch_operands = 0 : i64, tpu.core_type = #tpu.core_type<tc>, window_params = [{transform_indices = @transform_0, window_bounds = array<i64: 24, 128>}, {pipeline_mode = #tpu.pipeline_mode<synchronous>, transform_indices = @transform_1, window_bounds = array<i64: 128, 32>}, {pipeline_mode = #tpu.pipeline_mode<synchronous>, transform_indices = @transform_2, window_bounds = array<i64: 1, 32>}, {transform_indices = @transform_3, window_bounds = array<i64: 24, 32>}]} {
    %c0 = arith.constant 0 : index
    %c0_0 = arith.constant 0 : index
    %0 = vector.load %arg1[%c0, %c0_0] : memref<24x128xf32, #tpu.memory_space<vmem>>, vector<24x128xf32>
    %c0_1 = arith.constant 0 : index
    %c0_2 = arith.constant 0 : index
    %1 = vector.load %arg2[%c0_1, %c0_2] : memref<128x32xf32, #tpu.memory_space<vmem>>, vector<128x32xf32>
    %cst = arith.constant dense<0.000000e+00> : vector<24x32xf32>
    %2 = tpu.matmul %0, %1, %cst {dimension_numbers = #tpu.dot_dimension_numbers<[1], [0], [0], [1], [0, 0, 1, 1], [], []>, precision = #tpu.contract_precision<fp32>} : vector<24x128xf32>, vector<128x32xf32>, vector<24x32xf32> -> vector<24x32xf32>
    %c0_3 = arith.constant 0 : index
    %c0_4 = arith.constant 0 : index
    %3 = vector.load %arg3[%c0_3, %c0_4] : memref<1x32xf32, #tpu.memory_space<vmem>>, vector<1x32xf32>
    %4 = vector.broadcast %3 : vector<1x32xf32> to vector<24x32xf32>
    %5 = arith.addf %2, %4 : vector<24x32xf32>
    %c0_5 = arith.constant 0 : index
    %c0_6 = arith.constant 0 : index
    %6 = vector.load %arg4[%c0_5, %c0_6] : memref<24x32xf32, #tpu.memory_space<vmem>>, vector<24x32xf32>
    tpu.vector_store %arg4[%c0_5, %c0_6], %5 {strides = array<i32>} : memref<24x32xf32, #tpu.memory_space<vmem>>, vector<24x32xf32>,
    return
  }
  func.func @transform_0(%arg0: i32) -> (i32, i32) {
    %c0_i32 = arith.constant 0 : i32
    %c0_i32_0 = arith.constant 0 : i32
    return %arg0, %c0_i32 : i32, i32
  }
  func.func @transform_1(%arg0: i32) -> (i32, i32) {
    %c0_i32 = arith.constant 0 : i32
    %c0_i32_0 = arith.constant 0 : i32
    %c0_i32_1 = arith.constant 0 : i32
    return %c0_i32, %c0_i32_0 : i32, i32
  }
  func.func @transform_2(%arg0: i32) -> (i32, i32) {
    %c0_i32 = arith.constant 0 : i32
    %c0_i32_0 = arith.constant 0 : i32
    %c0_i32_1 = arith.constant 0 : i32
    return %c0_i32, %c0_i32_0 : i32, i32
  }
  func.func @transform_3(%arg0: i32) -> (i32, i32) {
    %c0_i32 = arith.constant 0 : i32
    %c0_i32_0 = arith.constant 0 : i32
    return %arg0, %c0_i32 : i32, i32
  }
}

</mosaic_0001>

<llo_original>
// kernel: tpu_custom_call.1
$region0: #{tpu_custom_call.1}
  #allocation0 [shape = 'u32[]', space=smem, size = 0x4, offset = 0x4, fixed_abs, tag = 'smem constant byte address 0x4 - core index']
  #allocation1 [shape = 'u32[144,128]{1,0:T(1,128)}', space=vmem, size = 0x12000, scoped, tag = 'internal scratch']
  %s0 = inlined_call_operand.vmem [shape: f32[48,128], index: 0, kind: input, shape index: {}]
  %s1 = inlined_call_operand.vmem [shape: f32[128,32], index: 1, kind: input, shape index: {}]
  %s2 = inlined_call_operand.vmem [shape: f32[1,32], index: 2, kind: input, shape index: {}]
  %s3 = inlined_call_operand.vmem [shape: f32[48,32], index: 3, kind: output, shape index: {}]
  %s4 = sld [smem:[#allocation0]]
  $region45: #{tpu_custom_call.1} parent=0
    _
  %s6 = ssub.s32 1, %s4
  %s7 = scalar_select 0, %s6, %s4
  loop: start=0, step=1, limit=4
  $region2: #{tpu_custom_call.1} parent=0 // loop_pre_header
    _
  $region3: #{tpu_custom_call.1} parent=0 // loop_header
    %s9 = sphi 0, %s13
    %p10 = scmp.ge.s32.totalorder %s9, 4
    %s19 = sphi 0, %s21
    %s22 = sphi 0, %s19
    %s23 = sphi 0, %s22
    %s39 = sphi 0, %s23
    %s43 = sphi 0, %s43
    %s45 = sphi 0, %s43
    %s46 = sphi 0, %s45
    %s60 = sphi 0, %s46
    %s64 = sphi 0, %s64
    %s66 = sphi 0, %s64
    %s67 = sphi 0, %s66
    %s81 = sphi 0, %s67
    %s87 = sphi 0, %s89
    %s90 = sphi 0, %s87
    %s91 = sphi 0, %s90
    %s107 = sphi 0, %s91
  $region4: #{tpu_custom_call.1} parent=0 // loop_header_branch
    %12 = sbr.rel (%p10) target = $region8
  $region5: #{tpu_custom_call.1} parent=0 // loop_body
    %s14 = ssub.s32 %s9, 1
    %s15 = ssub.s32 %s9, 2
    %s16 = sadd.s32 %s9, 1
    %s17 = ssub.s32 %s9, %s16
    %p18 = scmp.eq.s32.totalorder %s17, 0
    %s20 = sadd.s32 %s19, 1
    %s21 = scalar_select %p18, %s19, %s20
    %p24 = pneg %p18
    %p25 = scmp.eq.s32.totalorder %s9, 1
    %p26 = por %p24, %p25
    %p27 = scmp.ne.s32.totalorder %s19, %s22
    %p28 = scmp.eq.s32.totalorder %s9, 0
    %p29 = por %p27, %p28
    %p30 = scmp.ne.s32.totalorder %s19, %s22
    %p31 = scmp.eq.s32.totalorder %s14, 1
    %p32 = por %p30, %p31
    %p33 = scmp.ne.s32.totalorder %s22, %s23
    %p34 = scmp.eq.s32.totalorder %s14, 0
    %p35 = por %p33, %p34
    %p36 = scmp.ne.s32.totalorder %s22, %s23
    %p37 = scmp.eq.s32.totalorder %s15, 1
    %p38 = por %p36, %p37
    %p40 = scmp.ne.s32.totalorder %s23, %s39
    %p41 = scmp.eq.s32.totalorder %s15, 0
    %p42 = por %p40, %p41
    %s44 = sadd.s32 %s43, 1
    %p47 = scmp.eq.s32.totalorder %s9, 1
    %p48 = scmp.ne.s32.totalorder %s43, %s45
    %p49 = scmp.eq.s32.totalorder %s9, 0
    %p50 = por %p48, %p49
    %p51 = scmp.ne.s32.totalorder %s43, %s45
    %p52 = scmp.eq.s32.totalorder %s14, 1
    %p53 = por %p51, %p52
    %p54 = scmp.ne.s32.totalorder %s45, %s46
    %p55 = scmp.eq.s32.totalorder %s14, 0
    %p56 = por %p54, %p55
    %p57 = scmp.ne.s32.totalorder %s45, %s46
    %p58 = scmp.eq.s32.totalorder %s15, 1
    %p59 = por %p57, %p58
    %p61 = scmp.ne.s32.totalorder %s46, %s60
    %p62 = scmp.eq.s32.totalorder %s15, 0
    %p63 = por %p61, %p62
    %s65 = sadd.s32 %s64, 1
    %p68 = scmp.eq.s32.totalorder %s9, 1
    %p69 = scmp.ne.s32.totalorder %s64, %s66
    %p70 = scmp.eq.s32.totalorder %s9, 0
    %p71 = por %p69, %p70
    %p72 = scmp.ne.s32.totalorder %s64, %s66
    %p73 = scmp.eq.s32.totalorder %s14, 1
    %p74 = por %p72, %p73
    %p75 = scmp.ne.s32.totalorder %s66, %s67
    %p76 = scmp.eq.s32.totalorder %s14, 0
    %p77 = por %p75, %p76
    %p78 = scmp.ne.s32.totalorder %s66, %s67
    %p79 = scmp.eq.s32.totalorder %s15, 1
    %p80 = por %p78, %p79
    %p82 = scmp.ne.s32.totalorder %s67, %s81
    %p83 = scmp.eq.s32.totalorder %s15, 0
    %p84 = por %p82, %p83
    %s85 = ssub.s32 %s9, %s16
    %p86 = scmp.eq.s32.totalorder %s85, 0
    %s88 = sadd.s32 %s87, 1
    %s89 = scalar_select %p86, %s87, %s88
    %p92 = pneg %p86
    %p93 = scmp.eq.s32.totalorder %s9, 1
    %p94 = por %p92, %p93
    %p95 = scmp.ne.s32.totalorder %s87, %s90
    %p96 = scmp.eq.s32.totalorder %s9, 0
    %p97 = por %p95, %p96
    %p98 = scmp.ne.s32.totalorder %s87, %s90
    %p99 = scmp.eq.s32.totalorder %s14, 1
    %p100 = por %p98, %p99
    %p101 = scmp.ne.s32.totalorder %s90, %s91
    %p102 = scmp.eq.s32.totalorder %s14, 0
    %p103 = por %p101, %p102
    %p104 = scmp.ne.s32.totalorder %s90, %s91
    %p105 = scmp.eq.s32.totalorder %s15, 1
    %p106 = por %p104, %p105
    %p108 = scmp.ne.s32.totalorder %s91, %s107
    %p109 = scmp.eq.s32.totalorder %s15, 0
    %p110 = por %p108, %p109
    %p111 = scmp.le.s32.totalorder 1, %s9
    %p112 = scmp.lt.s32.totalorder %s9, 3
    %p113 = pnand %p111, %p112
    %p114 = pneg %p113
    // Predicated region
    $region9: #{tpu_custom_call.1} parent=5 // pred_check
      _
    $region10: #{tpu_custom_call.1} parent=5 // pred_check_branch
      %116 = sbr.rel (%p113) target = $region12
    $region11: #{tpu_custom_call.1} parent=5 // pred_region
      %s117 = ssub.s32 %s9, 1
      // Predicated region
      $region13: #{tpu_custom_call.1} parent=11 // pred_check
        %p118 = pneg %p56
      $region14: #{tpu_custom_call.1} parent=11 // pred_check_branch
        %120 = sbr.rel (%p118) target = $region16
      $region15: #{tpu_custom_call.1} parent=11 // pred_region
        _
      $region16: #{tpu_custom_call.1} parent=11 // pred_fallthru
        _
      // Predicated region
      $region17: #{tpu_custom_call.1} parent=11 // pred_check
        %p121 = pneg %p77
      $region18: #{tpu_custom_call.1} parent=11 // pred_check_branch
        %123 = sbr.rel (%p121) target = $region20
      $region19: #{tpu_custom_call.1} parent=11 // pred_region
        _
      $region20: #{tpu_custom_call.1} parent=11 // pred_fallthru
        _
    $region12: #{tpu_custom_call.1} parent=5 // pred_fallthru
      _
    %p124 = scmp.lt.s32.totalorder %s9, 2
    // Predicated region
    $region21: #{tpu_custom_call.1} parent=5 // pred_check
      %p125 = pneg %p124
    $region22: #{tpu_custom_call.1} parent=5 // pred_check_branch
      %127 = sbr.rel (%p125) target = $region24
    $region23: #{tpu_custom_call.1} parent=5 // pred_region
      // Predicated region
      $region25: #{tpu_custom_call.1} parent=23 // pred_check
        %p128 = pneg %p29
      $region26: #{tpu_custom_call.1} parent=23 // pred_check_branch
        %130 = sbr.rel (%p128) target = $region28
      $region27: #{tpu_custom_call.1} parent=23 // pred_region
        %s131 = smul.u32 3, %s9
        %p132 = scmp.lt.s32.totalorder %s131, 5
        %s133 = scalar_select %p132, %s131, 5
        %s134 = smul.addr %s133, 8
        %s135 = scalar_lea.vmem %s0, %s134
        %s136 = smul.u32 3, %s9
      $region28: #{tpu_custom_call.1} parent=23 // pred_fallthru
        _
    $region24: #{tpu_custom_call.1} parent=5 // pred_fallthru
      _
    %p137 = scmp.le.s32.totalorder 1, %s9
    %p138 = scmp.lt.s32.totalorder %s9, 3
    %p139 = pnand %p137, %p138
    %p140 = pneg %p139
    // Predicated region
    $region29: #{tpu_custom_call.1} parent=5 // pred_check
      _
    $region30: #{tpu_custom_call.1} parent=5 // pred_check_branch
      %142 = sbr.rel (%p139) target = $region32
    $region31: #{tpu_custom_call.1} parent=5 // pred_region
      %s143 = ssub.s32 %s9, 1
      %s144 = smul.u32 3, %s14
      %p145 = scmp.lt.s32.totalorder %s144, 5
      %s146 = scalar_select %p145, %s144, 5
      %s147 = smul.addr %s146, 8
      %s148 = scalar_lea.vmem %s0, %s147
      %p149 = pneg %p35
      %p150 = pneg %p32
      %p151 = pneg %p56
      %p152 = pneg %p53
      %p153 = pneg %p77
      %p154 = pneg %p74
      %p155 = pneg %p103
      %p156 = pneg %p100
      %s157 = smul.u32 3, %s14
      %p158 = scmp.lt.s32.totalorder %s157, 5
      %s159 = scalar_select %p158, %s157, 5
      %s160 = smul.addr %s159, 8
      %s161 = scalar_lea.vmem %s3, %s160
      %s162 = smul.u32 3, %s14
      %p163 = scmp.lt.s32.totalorder %s162, 5
      %s164 = scalar_select %p163, %s162, 5
      %s165 = smul.addr %s164, 8
      %s166 = scalar_lea.vmem %s0, %s165
      %s167 = smul.u32 3, %s14
      %s168 = smul.u32 3, %s14
      %p169 = scmp.lt.s32.totalorder %s168, 5
      %s170 = scalar_select %p169, %s168, 5
      %s171 = smul.addr %s170, 8
      %s172 = scalar_lea.vmem %s3, %s171
      %s173 = smul.u32 3, %s14
      %v174 = vld [vmem:[%s166] sm:$0xff]
      %v175 = vld [vmem:[%s166 + $0x8] sm:$0xff]
      %v176 = vld [vmem:[%s166 + $0x10] sm:$0xff]
      %v177 = vld [vmem:[%s1] sm:$0xff]
      %v178 = vld [vmem:[%s1 + $0x8] sm:$0xff]
      %v179 = vld [vmem:[%s1 + $0x10] sm:$0xff]
      %v180 = vld [vmem:[%s1 + $0x18] sm:$0xff]
      %v181 = vld [vmem:[%s1 + $0x20] sm:$0xff]
      %v182 = vld [vmem:[%s1 + $0x28] sm:$0xff]
      %v183 = vld [vmem:[%s1 + $0x30] sm:$0xff]
      %v184 = vld [vmem:[%s1 + $0x38] sm:$0xff]
      %v185 = vld [vmem:[%s1 + $0x40] sm:$0xff]
      %v186 = vld [vmem:[%s1 + $0x48] sm:$0xff]
      %v187 = vld [vmem:[%s1 + $0x50] sm:$0xff]
      %v188 = vld [vmem:[%s1 + $0x58] sm:$0xff]
      %v189 = vld [vmem:[%s1 + $0x60] sm:$0xff]
      %v190 = vld [vmem:[%s1 + $0x68] sm:$0xff]
      %v191 = vld [vmem:[%s1 + $0x70] sm:$0xff]
      %v192 = vld [vmem:[%s1 + $0x78] sm:$0xff]
      %v193 = vld [vmem:[%s2] sm:$0x1]
      %v195 = vlaneseq
      %v196 = vshrl.u32 %v195, 7
      %v197 = vsub.s32 0, %v196
      %v198 = vrot.slane %v193, %v197
      %200 = vmatprep.subr.mxu0 0.0
      %v201 = vand.u32 %v177, 4294901760
      %202 = vmatpush1.msra.mxu0 %v201
      %203 = vmatprep.subr.mxu0 0.0
      %v204 = vand.u32 %v178, 4294901760
      %205 = vmatpush1.msra.mxu0 %v204
      %206 = vmatprep.subr.mxu0 0.0
      %v207 = vand.u32 %v179, 4294901760
      %208 = vmatpush1.msra.mxu0 %v207
      %209 = vmatprep.subr.mxu0 0.0
      %v210 = vand.u32 %v180, 4294901760
      %211 = vmatpush1.msra.mxu0 %v210
      %212 = vmatprep.subr.mxu0 0.0
      %v213 = vand.u32 %v181, 4294901760
      %214 = vmatpush1.msra.mxu0 %v213
      %215 = vmatprep.subr.mxu0 0.0
      %v216 = vand.u32 %v182, 4294901760
      %217 = vmatpush1.msra.mxu0 %v216
      %218 = vmatprep.subr.mxu0 0.0
      %v219 = vand.u32 %v183, 4294901760
      %220 = vmatpush1.msra.mxu0 %v219
      %221 = vmatprep.subr.mxu0 0.0
      %v222 = vand.u32 %v184, 4294901760
      %223 = vmatpush1.msra.mxu0 %v222
      %224 = vmatprep.subr.mxu0 0.0
      %v225 = vand.u32 %v185, 4294901760
      %226 = vmatpush1.msra.mxu0 %v225
      %227 = vmatprep.subr.mxu0 0.0
      %v228 = vand.u32 %v186, 4294901760
      %229 = vmatpush1.msra.mxu0 %v228
      %230 = vmatprep.subr.mxu0 0.0
      %v231 = vand.u32 %v187, 4294901760
      %232 = vmatpush1.msra.mxu0 %v231
      %233 = vmatprep.subr.mxu0 0.0
      %v234 = vand.u32 %v188, 4294901760
      %235 = vmatpush1.msra.mxu0 %v234
      %236 = vmatprep.subr.mxu0 0.0
      %v237 = vand.u32 %v189, 4294901760
      %238 = vmatpush1.msra.mxu0 %v237
      %239 = vmatprep.subr.mxu0 0.0
      %v240 = vand.u32 %v190, 4294901760
      %241 = vmatpush1.msra.mxu0 %v240
      %242 = vmatprep.subr.mxu0 0.0
      %v243 = vand.u32 %v191, 4294901760
      %244 = vmatpush1.msra.mxu0 %v243
      %245 = vmatprep.subr.mxu0 0.0
      %v246 = vand.u32 %v192, 4294901760
      %247 = vmatpush1.msra.mxu0 %v246
      %248 = vmatprep.subr.mxu0 0.0
      %249 = vmatpush1.msra.mxu0 0.0
      %250 = vmatprep.subr.mxu0 0.0
      %251 = vmatpush1.msra.mxu0 0.0
      %252 = vmatprep.subr.mxu0 0.0
      %253 = vmatpush1.msra.mxu0 0.0
      %254 = vmatprep.subr.mxu0 0.0
      %255 = vmatpush1.msra.mxu0 0.0
      %256 = vmatprep.subr.mxu0 0.0
      %257 = vmatpush1.msra.mxu0 0.0
      %258 = vmatprep.subr.mxu0 0.0
      %259 = vmatpush1.msra.mxu0 0.0
      %260 = vmatprep.subr.mxu0 0.0
      %261 = vmatpush1.msra.mxu0 0.0
      %262 = vmatprep.subr.mxu0 0.0
      %263 = vmatpush1.msra.mxu0 0.0
      %264 = vmatprep.subr.mxu0 0.0
      %265 = vmatpush1.msra.mxu0 0.0
      %266 = vmatprep.subr.mxu0 0.0
      %267 = vmatpush1.msra.mxu0 0.0
      %268 = vmatprep.subr.mxu0 0.0
      %269 = vmatpush1.msra.mxu0 0.0
      %270 = vmatprep.subr.mxu0 0.0
      %271 = vmatpush1.msra.mxu0 0.0
      %272 = vmatprep.subr.mxu0 0.0
      %273 = vmatpush1.msra.mxu0 0.0
      %274 = vmatprep.subr.mxu0 0.0
      %275 = vmatpush1.msra.mxu0 0.0
      %276 = vmatprep.subr.mxu0 0.0
      %277 = vmatpush1.msra.mxu0 0.0
      %278 = vmatprep.subr.mxu0 0.0
      %279 = vmatpush1.msra.mxu0 0.0
      %280 = vmatprep.mubr.f32.mxu0 0.0
      %v281 = vand.u32 %v174, 4294901760
      %v282 = vsub.f32 %v174, %v281
      %v283 = vand.u32 %v282, 4294901760
      %v284 = vsub.f32 %v282, %v283
      %v285 = vand.u32 %v284, 4294901760
      %286 = vmatmul.mubr.f32.gmra.mrb[0].mxu0 %v285
      %v287 = vpop.f32.mrb[0].mxu0
      %v288 = vadd.f32 %v198, %v287
      %v289 = vpop.f32.mrb[0].mxu0
      %290 = vmatprep.mubr.f32.mxu0 0.0
      %v291 = vand.u32 %v175, 4294901760
      %v292 = vsub.f32 %v175, %v291
      %v293 = vand.u32 %v292, 4294901760
      %v294 = vsub.f32 %v292, %v293
      %v295 = vand.u32 %v294, 4294901760
      %296 = vmatmul.mubr.f32.gmra.mrb[0].mxu0 %v295
      %v297 = vpop.f32.mrb[0].mxu0
      %v298 = vadd.f32 %v198, %v297
      %v299 = vpop.f32.mrb[0].mxu0
      %300 = vmatprep.mubr.f32.mxu0 0.0
      %v301 = vand.u32 %v176, 4294901760
      %v302 = vsub.f32 %v176, %v301
      %v303 = vand.u32 %v302, 4294901760
      %v304 = vsub.f32 %v302, %v303
      %v305 = vand.u32 %v304, 4294901760
      %306 = vmatmul.mubr.f32.gmra.mrb[0].mxu0 %v305
      %v307 = vpop.f32.mrb[0].mxu0
      %v308 = vadd.f32 %v198, %v307
      %v309 = vpop.f32.mrb[0].mxu0
      %310 = vdwg.mxu0
      %311 = vmatprep.subr.mxu0 0.0
      %v312 = vand.u32 %v177, 4294901760
      %v313 = vsub.f32 %v177, %v312
      %v314 = vand.u32 %v313, 4294901760
      %v315 = vsub.f32 %v313, %v314
      %v316 = vand.u32 %v315, 4294901760
      %317 = vmatpush1.msra.mxu0 %v316
      %318 = vmatprep.subr.mxu0 0.0
      %v319 = vand.u32 %v178, 4294901760
      %v320 = vsub.f32 %v178, %v319
      %v321 = vand.u32 %v320, 4294901760
      %v322 = vsub.f32 %v320, %v321
      %v323 = vand.u32 %v322, 4294901760
      %324 = vmatpush1.msra.mxu0 %v323
      %325 = vmatprep.subr.mxu0 0.0
      %v326 = vand.u32 %v179, 4294901760
      %v327 = vsub.f32 %v179, %v326
      %v328 = vand.u32 %v327, 4294901760
      %v329 = vsub.f32 %v327, %v328
      %v330 = vand.u32 %v329, 4294901760
      %331 = vmatpush1.msra.mxu0 %v330
      %332 = vmatprep.subr.mxu0 0.0
      %v333 = vand.u32 %v180, 4294901760
      %v334 = vsub.f32 %v180, %v333
      %v335 = vand.u32 %v334, 4294901760
      %v336 = vsub.f32 %v334, %v335
      %v337 = vand.u32 %v336, 4294901760
      %338 = vmatpush1.msra.mxu0 %v337
      %339 = vmatprep.subr.mxu0 0.0
      %v340 = vand.u32 %v181, 4294901760
      %v341 = vsub.f32 %v181, %v340
      %v342 = vand.u32 %v341, 4294901760
      %v343 = vsub.f32 %v341, %v342
      %v344 = vand.u32 %v343, 4294901760
      %345 = vmatpush1.msra.mxu0 %v344
      %346 = vmatprep.subr.mxu0 0.0
      %v347 = vand.u32 %v182, 4294901760
      %v348 = vsub.f32 %v182, %v347
      %v349 = vand.u32 %v348, 4294901760
      %v350 = vsub.f32 %v348, %v349
      %v351 = vand.u32 %v350, 4294901760
      %352 = vmatpush1.msra.mxu0 %v351
      %353 = vmatprep.subr.mxu0 0.0
      %v354 = vand.u32 %v183, 4294901760
      %v355 = vsub.f32 %v183, %v354
      %v356 = vand.u32 %v355, 4294901760
      %v357 = vsub.f32 %v355, %v356
      %v358 = vand.u32 %v357, 4294901760
      %359 = vmatpush1.msra.mxu0 %v358
      %360 = vmatprep.subr.mxu0 0.0
      %v361 = vand.u32 %v184, 4294901760
      %v362 = vsub.f32 %v184, %v361
      %v363 = vand.u32 %v362, 4294901760
      %v364 = vsub.f32 %v362, %v363
      %v365 = vand.u32 %v364, 4294901760
      %366 = vmatpush1.msra.mxu0 %v365
      %367 = vmatprep.subr.mxu0 0.0
      %v368 = vand.u32 %v185, 4294901760
      %v369 = vsub.f32 %v185, %v368
      %v370 = vand.u32 %v369, 4294901760
      %v371 = vsub.f32 %v369, %v370
      %v372 = vand.u32 %v371, 4294901760
      %373 = vmatpush1.msra.mxu0 %v372
      %374 = vmatprep.subr.mxu0 0.0
      %v375 = vand.u32 %v186, 4294901760
      %v376 = vsub.f32 %v186, %v375
      %v377 = vand.u32 %v376, 4294901760
      %v378 = vsub.f32 %v376, %v377
      %v379 = vand.u32 %v378, 4294901760
      %380 = vmatpush1.msra.mxu0 %v379
      %381 = vmatprep.subr.mxu0 0.0
      %v382 = vand.u32 %v187, 4294901760
      %v383 = vsub.f32 %v187, %v382
      %v384 = vand.u32 %v383, 4294901760
      %v385 = vsub.f32 %v383, %v384
      %v386 = vand.u32 %v385, 4294901760
      %387 = vmatpush1.msra.mxu0 %v386
      %388 = vmatprep.subr.mxu0 0.0
      %v389 = vand.u32 %v188, 4294901760
      %v390 = vsub.f32 %v188, %v389
      %v391 = vand.u32 %v390, 4294901760
      %v392 = vsub.f32 %v390, %v391
      %v393 = vand.u32 %v392, 4294901760
      %394 = vmatpush1.msra.mxu0 %v393
      %395 = vmatprep.subr.mxu0 0.0
      %v396 = vand.u32 %v189, 4294901760
      %v397 = vsub.f32 %v189, %v396
      %v398 = vand.u32 %v397, 4294901760
      %v399 = vsub.f32 %v397, %v398
      %v400 = vand.u32 %v399, 4294901760
      %401 = vmatpush1.msra.mxu0 %v400
      %402 = vmatprep.subr.mxu0 0.0
      %v403 = vand.u32 %v190, 4294901760
      %v404 = vsub.f32 %v190, %v403
      %v405 = vand.u32 %v404, 4294901760
      %v406 = vsub.f32 %v404, %v405
      %v407 = vand.u32 %v406, 4294901760
      %408 = vmatpush1.msra.mxu0 %v407
      %409 = vmatprep.subr.mxu0 0.0
      %v410 = vand.u32 %v191, 4294901760
      %v411 = vsub.f32 %v191, %v410
      %v412 = vand.u32 %v411, 4294901760
      %v413 = vsub.f32 %v411, %v412
      %v414 = vand.u32 %v413, 4294901760
      %415 = vmatpush1.msra.mxu0 %v414
      %416 = vmatprep.subr.mxu0 0.0
      %v417 = vand.u32 %v192, 4294901760
      %v418 = vsub.f32 %v192, %v417
      %v419 = vand.u32 %v418, 4294901760
      %v420 = vsub.f32 %v418, %v419
      %v421 = vand.u32 %v420, 4294901760
      %422 = vmatpush1.msra.mxu0 %v421
      %423 = vmatprep.subr.mxu0 0.0
      %424 = vmatpush1.msra.mxu0 0.0
      %425 = vmatprep.subr.mxu0 0.0
      %426 = vmatpush1.msra.mxu0 0.0
      %427 = vmatprep.subr.mxu0 0.0
      %428 = vmatpush1.msra.mxu0 0.0
      %429 = vmatprep.subr.mxu0 0.0
      %430 = vmatpush1.msra.mxu0 0.0
      %431 = vmatprep.subr.mxu0 0.0
      %432 = vmatpush1.msra.mxu0 0.0
      %433 = vmatprep.subr.mxu0 0.0
      %434 = vmatpush1.msra.mxu0 0.0
      %435 = vmatprep.subr.mxu0 0.0
      %436 = vmatpush1.msra.mxu0 0.0
      %437 = vmatprep.subr.mxu0 0.0
      %438 = vmatpush1.msra.mxu0 0.0
      %439 = vmatprep.subr.mxu0 0.0
      %440 = vmatpush1.msra.mxu0 0.0
      %441 = vmatprep.subr.mxu0 0.0
      %442 = vmatpush1.msra.mxu0 0.0
      %443 = vmatprep.subr.mxu0 0.0
      %444 = vmatpush1.msra.mxu0 0.0
      %445 = vmatprep.subr.mxu0 0.0
      %446 = vmatpush1.msra.mxu0 0.0
      %447 = vmatprep.subr.mxu0 0.0
      %448 = vmatpush1.msra.mxu0 0.0
      %449 = vmatprep.subr.mxu0 0.0
      %450 = vmatpush1.msra.mxu0 0.0
      %451 = vmatprep.subr.mxu0 0.0
      %452 = vmatpush1.msra.mxu0 0.0
      %453 = vmatprep.subr.mxu0 0.0
      %454 = vmatpush1.msra.mxu0 0.0
      %455 = vmatprep.mubr.f32.mxu0 0.0
      %v456 = vand.u32 %v174, 4294901760
      %457 = vmatmul.mubr.f32.gmra.mrb[0].mxu0 %v456
      %v458 = vpop.f32.mrb[0].mxu0
      %v459 = vadd.f32 %v288, %v458
      %v460 = vpop.f32.mrb[0].mxu0
      %461 = vmatprep.mubr.f32.mxu0 0.0
      %v462 = vand.u32 %v175, 4294901760
      %463 = vmatmul.mubr.f32.gmra.mrb[0].mxu0 %v462
      %v464 = vpop.f32.mrb[0].mxu0
      %v465 = vadd.f32 %v298, %v464
      %v466 = vpop.f32.mrb[0].mxu0
      %467 = vmatprep.mubr.f32.mxu0 0.0
      %v468 = vand.u32 %v176, 4294901760
      %469 = vmatmul.mubr.f32.gmra.mrb[0].mxu0 %v468
      %v470 = vpop.f32.mrb[0].mxu0
      %v471 = vadd.f32 %v308, %v470
      %v472 = vpop.f32.mrb[0].mxu0
      %473 = vdwg.mxu0
      %474 = vmatprep.subr.mxu0 0.0
      %v475 = vand.u32 %v177, 4294901760
      %v476 = vsub.f32 %v177, %v475
      %477 = vmatpush1.msra.mxu0 %v476
      %478 = vmatprep.subr.mxu0 0.0
      %v479 = vand.u32 %v178, 4294901760
      %v480 = vsub.f32 %v178, %v479
      %481 = vmatpush1.msra.mxu0 %v480
      %482 = vmatprep.subr.mxu0 0.0
      %v483 = vand.u32 %v179, 4294901760
      %v484 = vsub.f32 %v179, %v483
      %485 = vmatpush1.msra.mxu0 %v484
      %486 = vmatprep.subr.mxu0 0.0
      %v487 = vand.u32 %v180, 4294901760
      %v488 = vsub.f32 %v180, %v487
      %489 = vmatpush1.msra.mxu0 %v488
      %490 = vmatprep.subr.mxu0 0.0
      %v491 = vand.u32 %v181, 4294901760
      %v492 = vsub.f32 %v181, %v491
      %493 = vmatpush1.msra.mxu0 %v492
      %494 = vmatprep.subr.mxu0 0.0
      %v495 = vand.u32 %v182, 4294901760
      %v496 = vsub.f32 %v182, %v495
      %497 = vmatpush1.msra.mxu0 %v496
      %498 = vmatprep.subr.mxu0 0.0
      %v499 = vand.u32 %v183, 4294901760
      %v500 = vsub.f32 %v183, %v499
      %501 = vmatpush1.msra.mxu0 %v500
      %502 = vmatprep.subr.mxu0 0.0
      %v503 = vand.u32 %v184, 4294901760
      %v504 = vsub.f32 %v184, %v503
      %505 = vmatpush1.msra.mxu0 %v504
      %506 = vmatprep.subr.mxu0 0.0
      %v507 = vand.u32 %v185, 4294901760
      %v508 = vsub.f32 %v185, %v507
      %509 = vmatpush1.msra.mxu0 %v508
      %510 = vmatprep.subr.mxu0 0.0
      %v511 = vand.u32 %v186, 4294901760
      %v512 = vsub.f32 %v186, %v511
      %513 = vmatpush1.msra.mxu0 %v512
      %514 = vmatprep.subr.mxu0 0.0
      %v515 = vand.u32 %v187, 4294901760
      %v516 = vsub.f32 %v187, %v515
      %517 = vmatpush1.msra.mxu0 %v516
      %518 = vmatprep.subr.mxu0 0.0
      %v519 = vand.u32 %v188, 4294901760
      %v520 = vsub.f32 %v188, %v519
      %521 = vmatpush1.msra.mxu0 %v520
      %522 = vmatprep.subr.mxu0 0.0
      %v523 = vand.u32 %v189, 4294901760
      %v524 = vsub.f32 %v189, %v523
      %525 = vmatpush1.msra.mxu0 %v524
      %526 = vmatprep.subr.mxu0 0.0
      %v527 = vand.u32 %v190, 4294901760
      %v528 = vsub.f32 %v190, %v527
      %529 = vmatpush1.msra.mxu0 %v528
      %530 = vmatprep.subr.mxu0 0.0
      %v531 = vand.u32 %v191, 4294901760
      %v532 = vsub.f32 %v191, %v531
      %533 = vmatpush1.msra.mxu0 %v532
      %534 = vmatprep.subr.mxu0 0.0
      %v535 = vand.u32 %v192, 4294901760
      %v536 = vsub.f32 %v192, %v535
      %537 = vmatpush1.msra.mxu0 %v536
      %538 = vmatprep.subr.mxu0 0.0
      %539 = vmatpush1.msra.mxu0 0.0
      %540 = vmatprep.subr.mxu0 0.0
      %541 = vmatpush1.msra.mxu0 0.0
      %542 = vmatprep.subr.mxu0 0.0
      %543 = vmatpush1.msra.mxu0 0.0
      %544 = vmatprep.subr.mxu0 0.0
      %545 = vmatpush1.msra.mxu0 0.0
      %546 = vmatprep.subr.mxu0 0.0
      %547 = vmatpush1.msra.mxu0 0.0
      %548 = vmatprep.subr.mxu0 0.0
      %549 = vmatpush1.msra.mxu0 0.0
      %550 = vmatprep.subr.mxu0 0.0
      %551 = vmatpush1.msra.mxu0 0.0
      %552 = vmatprep.subr.mxu0 0.0
      %553 = vmatpush1.msra.mxu0 0.0
      %554 = vmatprep.subr.mxu0 0.0
      %555 = vmatpush1.msra.mxu0 0.0
      %556 = vmatprep.subr.mxu0 0.0
      %557 = vmatpush1.msra.mxu0 0.0
      %558 = vmatprep.subr.mxu0 0.0
      %559 = vmatpush1.msra.mxu0 0.0
      %560 = vmatprep.subr.mxu0 0.0
      %561 = vmatpush1.msra.mxu0 0.0
      %562 = vmatprep.subr.mxu0 0.0
      %563 = vmatpush1.msra.mxu0 0.0
      %564 = vmatprep.subr.mxu0 0.0
      %565 = vmatpush1.msra.mxu0 0.0
      %566 = vmatprep.subr.mxu0 0.0
      %567 = vmatpush1.msra.mxu0 0.0
      %568 = vmatprep.subr.mxu0 0.0
      %569 = vmatpush1.msra.mxu0 0.0
      %570 = vmatprep.mubr.f32.mxu0 0.0
      %v571 = vand.u32 %v174, 4294901760
      %v572 = vsub.f32 %v174, %v571
      %573 = vmatmul.mubr.f32.gmra.mrb[0].mxu0 %v572
      %v574 = vpop.f32.mrb[0].mxu0
      %v575 = vadd.f32 %v459, %v574
      %v576 = vpop.f32.mrb[0].mxu0
      %577 = vmatprep.mubr.f32.mxu0 0.0
      %v578 = vand.u32 %v175, 4294901760
      %v579 = vsub.f32 %v175, %v578
      %580 = vmatmul.mubr.f32.gmra.mrb[0].mxu0 %v579
      %v581 = vpop.f32.mrb[0].mxu0
      %v582 = vadd.f32 %v465, %v581
      %v583 = vpop.f32.mrb[0].mxu0
      %584 = vmatprep.mubr.f32.mxu0 0.0
      %v585 = vand.u32 %v176, 4294901760
      %v586 = vsub.f32 %v176, %v585
      %587 = vmatmul.mubr.f32.gmra.mrb[0].mxu0 %v586
      %v588 = vpop.f32.mrb[0].mxu0
      %v589 = vadd.f32 %v471, %v588
      %v590 = vpop.f32.mrb[0].mxu0
      %591 = vdwg.mxu0
      %592 = vmatprep.subr.mxu0 0.0
      %v593 = vand.u32 %v177, 4294901760
      %594 = vmatpush1.msra.mxu0 %v593
      %595 = vmatprep.subr.mxu0 0.0
      %v596 = vand.u32 %v178, 4294901760
      %597 = vmatpush1.msra.mxu0 %v596
      %598 = vmatprep.subr.mxu0 0.0
      %v599 = vand.u32 %v179, 4294901760
      %600 = vmatpush1.msra.mxu0 %v599
      %601 = vmatprep.subr.mxu0 0.0
      %v602 = vand.u32 %v180, 4294901760
      %603 = vmatpush1.msra.mxu0 %v602
      %604 = vmatprep.subr.mxu0 0.0
      %v605 = vand.u32 %v181, 4294901760
      %606 = vmatpush1.msra.mxu0 %v605
      %607 = vmatprep.subr.mxu0 0.0
      %v608 = vand.u32 %v182, 4294901760
      %609 = vmatpush1.msra.mxu0 %v608
      %610 = vmatprep.subr.mxu0 0.0
      %v611 = vand.u32 %v183, 4294901760
      %612 = vmatpush1.msra.mxu0 %v611
      %613 = vmatprep.subr.mxu0 0.0
      %v614 = vand.u32 %v184, 4294901760
      %615 = vmatpush1.msra.mxu0 %v614
      %616 = vmatprep.subr.mxu0 0.0
      %v617 = vand.u32 %v185, 4294901760
      %618 = vmatpush1.msra.mxu0 %v617
      %619 = vmatprep.subr.mxu0 0.0
      %v620 = vand.u32 %v186, 4294901760
      %621 = vmatpush1.msra.mxu0 %v620
      %622 = vmatprep.subr.mxu0 0.0
      %v623 = vand.u32 %v187, 4294901760
      %624 = vmatpush1.msra.mxu0 %v623
      %625 = vmatprep.subr.mxu0 0.0
      %v626 = vand.u32 %v188, 4294901760
      %627 = vmatpush1.msra.mxu0 %v626
      %628 = vmatprep.subr.mxu0 0.0
      %v629 = vand.u32 %v189, 4294901760
      %630 = vmatpush1.msra.mxu0 %v629
      %631 = vmatprep.subr.mxu0 0.0
      %v632 = vand.u32 %v190, 4294901760
      %633 = vmatpush1.msra.mxu0 %v632
      %634 = vmatprep.subr.mxu0 0.0
      %v635 = vand.u32 %v191, 4294901760
      %636 = vmatpush1.msra.mxu0 %v635
      %637 = vmatprep.subr.mxu0 0.0
      %v638 = vand.u32 %v192, 4294901760
      %639 = vmatpush1.msra.mxu0 %v638
      %640 = vmatprep.subr.mxu0 0.0
      %641 = vmatpush1.msra.mxu0 0.0
      %642 = vmatprep.subr.mxu0 0.0
      %643 = vmatpush1.msra.mxu0 0.0
      %644 = vmatprep.subr.mxu0 0.0
      %645 = vmatpush1.msra.mxu0 0.0
      %646 = vmatprep.subr.mxu0 0.0
      %647 = vmatpush1.msra.mxu0 0.0
      %648 = vmatprep.subr.mxu0 0.0
      %649 = vmatpush1.msra.mxu0 0.0
      %650 = vmatprep.subr.mxu0 0.0
      %651 = vmatpush1.msra.mxu0 0.0
      %652 = vmatprep.subr.mxu0 0.0
      %653 = vmatpush1.msra.mxu0 0.0
      %654 = vmatprep.subr.mxu0 0.0
      %655 = vmatpush1.msra.mxu0 0.0
      %656 = vmatprep.subr.mxu0 0.0
      %657 = vmatpush1.msra.mxu0 0.0
      %658 = vmatprep.subr.mxu0 0.0
      %659 = vmatpush1.msra.mxu0 0.0
      %660 = vmatprep.subr.mxu0 0.0
      %661 = vmatpush1.msra.mxu0 0.0
      %662 = vmatprep.subr.mxu0 0.0
      %663 = vmatpush1.msra.mxu0 0.0
      %664 = vmatprep.subr.mxu0 0.0
      %665 = vmatpush1.msra.mxu0 0.0
      %666 = vmatprep.subr.mxu0 0.0
      %667 = vmatpush1.msra.mxu0 0.0
      %668 = vmatprep.subr.mxu0 0.0
      %669 = vmatpush1.msra.mxu0 0.0
      %670 = vmatprep.subr.mxu0 0.0
      %671 = vmatpush1.msra.mxu0 0.0
      %672 = vmatprep.mubr.f32.mxu0 0.0
      %v673 = vand.u32 %v174, 4294901760
      %v674 = vsub.f32 %v174, %v673
      %v675 = vand.u32 %v674, 4294901760
      %676 = vmatmul.mubr.f32.gmra.mrb[0].mxu0 %v675
      %v677 = vpop.f32.mrb[0].mxu0
      %v678 = vadd.f32 %v575, %v677
      %v679 = vpop.f32.mrb[0].mxu0
      %680 = vmatprep.mubr.f32.mxu0 0.0
      %v681 = vand.u32 %v175, 4294901760
      %v682 = vsub.f32 %v175, %v681
      %v683 = vand.u32 %v682, 4294901760
      %684 = vmatmul.mubr.f32.gmra.mrb[0].mxu0 %v683
      %v685 = vpop.f32.mrb[0].mxu0
      %v686 = vadd.f32 %v582, %v685
      %v687 = vpop.f32.mrb[0].mxu0
      %688 = vmatprep.mubr.f32.mxu0 0.0
      %v689 = vand.u32 %v176, 4294901760
      %v690 = vsub.f32 %v176, %v689
      %v691 = vand.u32 %v690, 4294901760
      %692 = vmatmul.mubr.f32.gmra.mrb[0].mxu0 %v691
      %v693 = vpop.f32.mrb[0].mxu0
      %v694 = vadd.f32 %v589, %v693
      %v695 = vpop.f32.mrb[0].mxu0
      %696 = vdwg.mxu0
      %697 = vmatprep.subr.mxu0 0.0
      %v698 = vand.u32 %v177, 4294901760
      %v699 = vsub.f32 %v177, %v698
      %v700 = vand.u32 %v699, 4294901760
      %701 = vmatpush1.msra.mxu0 %v700
      %702 = vmatprep.subr.mxu0 0.0
      %v703 = vand.u32 %v178, 4294901760
      %v704 = vsub.f32 %v178, %v703
      %v705 = vand.u32 %v704, 4294901760
      %706 = vmatpush1.msra.mxu0 %v705
      %707 = vmatprep.subr.mxu0 0.0
      %v708 = vand.u32 %v179, 4294901760
      %v709 = vsub.f32 %v179, %v708
      %v710 = vand.u32 %v709, 4294901760
      %711 = vmatpush1.msra.mxu0 %v710
      %712 = vmatprep.subr.mxu0 0.0
      %v713 = vand.u32 %v180, 4294901760
      %v714 = vsub.f32 %v180, %v713
      %v715 = vand.u32 %v714, 4294901760
      %716 = vmatpush1.msra.mxu0 %v715
      %717 = vmatprep.subr.mxu0 0.0
      %v718 = vand.u32 %v181, 4294901760
      %v719 = vsub.f32 %v181, %v718
      %v720 = vand.u32 %v719, 4294901760
      %721 = vmatpush1.msra.mxu0 %v720
      %722 = vmatprep.subr.mxu0 0.0
      %v723 = vand.u32 %v182, 4294901760
      %v724 = vsub.f32 %v182, %v723
      %v725 = vand.u32 %v724, 4294901760
      %726 = vmatpush1.msra.mxu0 %v725
      %727 = vmatprep.subr.mxu0 0.0
      %v728 = vand.u32 %v183, 4294901760
      %v729 = vsub.f32 %v183, %v728
      %v730 = vand.u32 %v729, 4294901760
      %731 = vmatpush1.msra.mxu0 %v730
      %732 = vmatprep.subr.mxu0 0.0
      %v733 = vand.u32 %v184, 4294901760
      %v734 = vsub.f32 %v184, %v733
      %v735 = vand.u32 %v734, 4294901760
      %736 = vmatpush1.msra.mxu0 %v735
      %737 = vmatprep.subr.mxu0 0.0
      %v738 = vand.u32 %v185, 4294901760
      %v739 = vsub.f32 %v185, %v738
      %v740 = vand.u32 %v739, 4294901760
      %741 = vmatpush1.msra.mxu0 %v740
      %742 = vmatprep.subr.mxu0 0.0
      %v743 = vand.u32 %v186, 4294901760
      %v744 = vsub.f32 %v186, %v743
      %v745 = vand.u32 %v744, 4294901760
      %746 = vmatpush1.msra.mxu0 %v745
      %747 = vmatprep.subr.mxu0 0.0
      %v748 = vand.u32 %v187, 4294901760
      %v749 = vsub.f32 %v187, %v748
      %v750 = vand.u32 %v749, 4294901760
      %751 = vmatpush1.msra.mxu0 %v750
      %752 = vmatprep.subr.mxu0 0.0
      %v753 = vand.u32 %v188, 4294901760
      %v754 = vsub.f32 %v188, %v753
      %v755 = vand.u32 %v754, 4294901760
      %756 = vmatpush1.msra.mxu0 %v755
      %757 = vmatprep.subr.mxu0 0.0
      %v758 = vand.u32 %v189, 4294901760
      %v759 = vsub.f32 %v189, %v758
      %v760 = vand.u32 %v759, 4294901760
      %761 = vmatpush1.msra.mxu0 %v760
      %762 = vmatprep.subr.mxu0 0.0
      %v763 = vand.u32 %v190, 4294901760
      %v764 = vsub.f32 %v190, %v763
      %v765 = vand.u32 %v764, 4294901760
      %766 = vmatpush1.msra.mxu0 %v765
      %767 = vmatprep.subr.mxu0 0.0
      %v768 = vand.u32 %v191, 4294901760
      %v769 = vsub.f32 %v191, %v768
      %v770 = vand.u32 %v769, 4294901760
      %771 = vmatpush1.msra.mxu0 %v770
      %772 = vmatprep.subr.mxu0 0.0
      %v773 = vand.u32 %v192, 4294901760
      %v774 = vsub.f32 %v192, %v773
      %v775 = vand.u32 %v774, 4294901760
      %776 = vmatpush1.msra.mxu0 %v775
      %777 = vmatprep.subr.mxu0 0.0
      %778 = vmatpush1.msra.mxu0 0.0
      %779 = vmatprep.subr.mxu0 0.0
      %780 = vmatpush1.msra.mxu0 0.0
      %781 = vmatprep.subr.mxu0 0.0
      %782 = vmatpush1.msra.mxu0 0.0
      %783 = vmatprep.subr.mxu0 0.0
      %784 = vmatpush1.msra.mxu0 0.0
      %785 = vmatprep.subr.mxu0 0.0
      %786 = vmatpush1.msra.mxu0 0.0
      %787 = vmatprep.subr.mxu0 0.0
      %788 = vmatpush1.msra.mxu0 0.0
      %789 = vmatprep.subr.mxu0 0.0
      %790 = vmatpush1.msra.mxu0 0.0
      %791 = vmatprep.subr.mxu0 0.0
      %792 = vmatpush1.msra.mxu0 0.0
      %793 = vmatprep.subr.mxu0 0.0
      %794 = vmatpush1.msra.mxu0 0.0
      %795 = vmatprep.subr.mxu0 0.0
      %796 = vmatpush1.msra.mxu0 0.0
      %797 = vmatprep.subr.mxu0 0.0
      %798 = vmatpush1.msra.mxu0 0.0
      %799 = vmatprep.subr.mxu0 0.0
      %800 = vmatpush1.msra.mxu0 0.0
      %801 = vmatprep.subr.mxu0 0.0
      %802 = vmatpush1.msra.mxu0 0.0
      %803 = vmatprep.subr.mxu0 0.0
      %804 = vmatpush1.msra.mxu0 0.0
      %805 = vmatprep.subr.mxu0 0.0
      %806 = vmatpush1.msra.mxu0 0.0
      %807 = vmatprep.subr.mxu0 0.0
      %808 = vmatpush1.msra.mxu0 0.0
      %809 = vmatprep.mubr.f32.mxu0 0.0
      %v810 = vand.u32 %v174, 4294901760
      %811 = vmatmul.mubr.f32.gmra.mrb[0].mxu0 %v810
      %v812 = vpop.f32.mrb[0].mxu0
      %v813 = vadd.f32 %v678, %v812
      %v814 = vpop.f32.mrb[0].mxu0
      %815 = vmatprep.mubr.f32.mxu0 0.0
      %v816 = vand.u32 %v175, 4294901760
      %817 = vmatmul.mubr.f32.gmra.mrb[0].mxu0 %v816
      %v818 = vpop.f32.mrb[0].mxu0
      %v819 = vadd.f32 %v686, %v818
      %v820 = vpop.f32.mrb[0].mxu0
      %821 = vmatprep.mubr.f32.mxu0 0.0
      %v822 = vand.u32 %v176, 4294901760
      %823 = vmatmul.mubr.f32.gmra.mrb[0].mxu0 %v822
      %v824 = vpop.f32.mrb[0].mxu0
      %v825 = vadd.f32 %v694, %v824
      %v826 = vpop.f32.mrb[0].mxu0
      %827 = vdwg.mxu0
      %828 = vmatprep.subr.mxu0 0.0
      %v829 = vand.u32 %v177, 4294901760
      %830 = vmatpush1.msra.mxu0 %v829
      %831 = vmatprep.subr.mxu0 0.0
      %v832 = vand.u32 %v178, 4294901760
      %833 = vmatpush1.msra.mxu0 %v832
      %834 = vmatprep.subr.mxu0 0.0
      %v835 = vand.u32 %v179, 4294901760
      %836 = vmatpush1.msra.mxu0 %v835
      %837 = vmatprep.subr.mxu0 0.0
      %v838 = vand.u32 %v180, 4294901760
      %839 = vmatpush1.msra.mxu0 %v838
      %840 = vmatprep.subr.mxu0 0.0
      %v841 = vand.u32 %v181, 4294901760
      %842 = vmatpush1.msra.mxu0 %v841
      %843 = vmatprep.subr.mxu0 0.0
      %v844 = vand.u32 %v182, 4294901760
      %845 = vmatpush1.msra.mxu0 %v844
      %846 = vmatprep.subr.mxu0 0.0
      %v847 = vand.u32 %v183, 4294901760
      %848 = vmatpush1.msra.mxu0 %v847
      %849 = vmatprep.subr.mxu0 0.0
      %v850 = vand.u32 %v184, 4294901760
      %851 = vmatpush1.msra.mxu0 %v850
      %852 = vmatprep.subr.mxu0 0.0
      %v853 = vand.u32 %v185, 4294901760
      %854 = vmatpush1.msra.mxu0 %v853
      %855 = vmatprep.subr.mxu0 0.0
      %v856 = vand.u32 %v186, 4294901760
      %857 = vmatpush1.msra.mxu0 %v856
      %858 = vmatprep.subr.mxu0 0.0
      %v859 = vand.u32 %v187, 4294901760
      %860 = vmatpush1.msra.mxu0 %v859
      %861 = vmatprep.subr.mxu0 0.0
      %v862 = vand.u32 %v188, 4294901760
      %863 = vmatpush1.msra.mxu0 %v862
      %864 = vmatprep.subr.mxu0 0.0
      %v865 = vand.u32 %v189, 4294901760
      %866 = vmatpush1.msra.mxu0 %v865
      %867 = vmatprep.subr.mxu0 0.0
      %v868 = vand.u32 %v190, 4294901760
      %869 = vmatpush1.msra.mxu0 %v868
      %870 = vmatprep.subr.mxu0 0.0
      %v871 = vand.u32 %v191, 4294901760
      %872 = vmatpush1.msra.mxu0 %v871
      %873 = vmatprep.subr.mxu0 0.0
      %v874 = vand.u32 %v192, 4294901760
      %875 = vmatpush1.msra.mxu0 %v874
      %876 = vmatprep.subr.mxu0 0.0
      %877 = vmatpush1.msra.mxu0 0.0
      %878 = vmatprep.subr.mxu0 0.0
      %879 = vmatpush1.msra.mxu0 0.0
      %880 = vmatprep.subr.mxu0 0.0
      %881 = vmatpush1.msra.mxu0 0.0
      %882 = vmatprep.subr.mxu0 0.0
      %883 = vmatpush1.msra.mxu0 0.0
      %884 = vmatprep.subr.mxu0 0.0
      %885 = vmatpush1.msra.mxu0 0.0
      %886 = vmatprep.subr.mxu0 0.0
      %887 = vmatpush1.msra.mxu0 0.0
      %888 = vmatprep.subr.mxu0 0.0
      %889 = vmatpush1.msra.mxu0 0.0
      %890 = vmatprep.subr.mxu0 0.0
      %891 = vmatpush1.msra.mxu0 0.0
      %892 = vmatprep.subr.mxu0 0.0
      %893 = vmatpush1.msra.mxu0 0.0
      %894 = vmatprep.subr.mxu0 0.0
      %895 = vmatpush1.msra.mxu0 0.0
      %896 = vmatprep.subr.mxu0 0.0
      %897 = vmatpush1.msra.mxu0 0.0
      %898 = vmatprep.subr.mxu0 0.0
      %899 = vmatpush1.msra.mxu0 0.0
      %900 = vmatprep.subr.mxu0 0.0
      %901 = vmatpush1.msra.mxu0 0.0
      %902 = vmatprep.subr.mxu0 0.0
      %903 = vmatpush1.msra.mxu0 0.0
      %904 = vmatprep.subr.mxu0 0.0
      %905 = vmatpush1.msra.mxu0 0.0
      %906 = vmatprep.subr.mxu0 0.0
      %907 = vmatpush1.msra.mxu0 0.0
      %908 = vmatprep.mubr.f32.mxu0 0.0
      %v909 = vand.u32 %v174, 4294901760
      %910 = vmatmul.mubr.f32.gmra.mrb[0].mxu0 %v909
      %v911 = vpop.f32.mrb[0].mxu0
      %v912 = vadd.f32 %v813, %v911
      %v913 = vpop.f32.mrb[0].mxu0
      %914 = vmatprep.mubr.f32.mxu0 0.0
      %v915 = vand.u32 %v175, 4294901760
      %916 = vmatmul.mubr.f32.gmra.mrb[0].mxu0 %v915
      %v917 = vpop.f32.mrb[0].mxu0
      %v918 = vadd.f32 %v819, %v917
      %v919 = vpop.f32.mrb[0].mxu0
      %920 = vmatprep.mubr.f32.mxu0 0.0
      %v921 = vand.u32 %v176, 4294901760
      %922 = vmatmul.mubr.f32.gmra.mrb[0].mxu0 %v921
      %v923 = vpop.f32.mrb[0].mxu0
      %v924 = vadd.f32 %v825, %v923
      %v925 = vpop.f32.mrb[0].mxu0
      %926 = vdwg.mxu0
      %vm927 = vcmask 261120
      %928 = vst.msk [vmem:[%s172] sm:$0xff] %vm927, %v912
      %929 = vst.msk [vmem:[%s172 + $0x8] sm:$0xff] %vm927, %v918
      %930 = vst.msk [vmem:[%s172 + $0x10] sm:$0xff] %vm927, %v924
      %s931 = smul.u32 3, %s14
      %p932 = scmp.lt.s32.totalorder %s931, 5
      %s933 = scalar_select %p932, %s931, 5
      %s934 = smul.addr %s933, 8
      %s935 = scalar_lea.vmem %s3, %s934
      // Predicated region
      $region33: #{tpu_custom_call.1} parent=31 // pred_check
        %p936 = pneg %p100
      $region34: #{tpu_custom_call.1} parent=31 // pred_check_branch
        %938 = sbr.rel (%p936) target = $region36
      $region35: #{tpu_custom_call.1} parent=31 // pred_region
        %s939 = smul.u32 3, %s14
      $region36: #{tpu_custom_call.1} parent=31 // pred_fallthru
        _
    $region32: #{tpu_custom_call.1} parent=5 // pred_fallthru
      _
    %p940 = scmp.le.s32.totalorder 2, %s9
    // Predicated region
    $region37: #{tpu_custom_call.1} parent=5 // pred_check
      %p941 = pneg %p940
    $region38: #{tpu_custom_call.1} parent=5 // pred_check_branch
      %943 = sbr.rel (%p941) target = $region40
    $region39: #{tpu_custom_call.1} parent=5 // pred_region
      %s944 = ssub.s32 %s9, 2
      // Predicated region
      $region41: #{tpu_custom_call.1} parent=39 // pred_check
        %p945 = pneg %p106
      $region42: #{tpu_custom_call.1} parent=39 // pred_check_branch
        %947 = sbr.rel (%p945) target = $region44
      $region43: #{tpu_custom_call.1} parent=39 // pred_region
        %s948 = smul.u32 3, %s15
        %p949 = scmp.lt.s32.totalorder %s948, 5
        %s950 = scalar_select %p949, %s948, 5
        %s951 = smul.addr %s950, 8
        %s952 = scalar_lea.vmem %s3, %s951
      $region44: #{tpu_custom_call.1} parent=39 // pred_fallthru
        _
    $region40: #{tpu_custom_call.1} parent=5 // pred_fallthru
      _
  $region6: #{tpu_custom_call.1} parent=0 // loop_footer
    %s13 = sadd.s32 1, %s9
  $region7: #{tpu_custom_call.1} parent=0 // loop_footer_branch
    %8 = sbr.rel target = $region3
  $region8: #{tpu_custom_call.1} parent=0 // loop_exit
    _

</llo_original>
